<compile_context>
chip_gen: v5e
topology: v5e:2x2
jax: 0.10.0
libtpu: 0.0.40
codegen_flags: <defaults>
</compile_context>

<pallas_src>
import functools

import jax
import jax.numpy as jnp
from jax.experimental import pallas as pl
from jax.experimental.pallas import tpu as pltpu


def _coord_loss_kernel(x_ref, t_ref, m_ref, o_ref, sum_ref, cnt_ref, *, beta):
    step = pl.program_id(0)

    @pl.when(step == 0)
    def _init():
        sum_ref[...] = jnp.zeros_like(sum_ref)
        cnt_ref[...] = jnp.zeros_like(cnt_ref)

    x = x_ref[...]
    t = t_ref[...]
    sel = m_ref[...] != 0

    d = x - t
    ad = jnp.abs(d)
    # smooth-L1 / Huber (PyTorch default beta = 1.0)
    per_elem = jnp.where(ad < beta, (0.5 / beta) * d * d, ad - 0.5 * beta)
    per_elem = jnp.where(sel, per_elem, 0.0)

    # Two-stage keepdims reductions (lanes then sublanes) -> (1, 1) partials.
    psum = jnp.sum(jnp.sum(per_elem, axis=1, keepdims=True), axis=0, keepdims=True)
    pcnt = jnp.sum(jnp.sum(sel.astype(jnp.int32), axis=1, keepdims=True),
                   axis=0, keepdims=True)

    sum_ref[...] += psum
    cnt_ref[...] += pcnt

    @pl.when(step == pl.num_programs(0) - 1)
    def _finalize():
        # Mean over all selected coordinate components (3 * #masked rows).
        # Empty selection -> 0/0 -> nan, matching torch.
        o_ref[...] = sum_ref[...] / cnt_ref[...].astype(jnp.float32)


def _round_up(x, m):
    return (x + m - 1) // m * m


def unimol_coord_loss(coords, target, mask_mask, *, beta=1.0,
                      lanes=256, max_block_rows=2048):
    """Pallas equivalent of F.smooth_l1_loss(input[mask], target[mask]) (mean)."""
    assert coords.shape == target.shape
    assert coords.shape[:-1] == mask_mask.shape
    B, L, C = coords.shape
    total = B * L * C

    x = coords.astype(jnp.float32).reshape(total)
    t = target.astype(jnp.float32).reshape(total)
    # Per-element selector; int8 keeps the mask stream at 1 byte/elem.
    m = jnp.broadcast_to(mask_mask[..., None], (B, L, C)).reshape(total).astype(jnp.int8)

    # Lane-dense slab; rows rounded to a multiple of 32 so f32 (8,128) and
    # int8 (32,128) block-tiling constraints are both satisfied.
    rows = _round_up(pl.cdiv(total, lanes), 32)
    if rows > max_block_rows:
        block_rows = max_block_rows
        rows = _round_up(rows, block_rows)
    else:
        block_rows = rows  # single grid step, block == full array
    padded = rows * lanes
    pad = padded - total
    x = jnp.pad(x, (0, pad)).reshape(rows, lanes)
    t = jnp.pad(t, (0, pad)).reshape(rows, lanes)
    m = jnp.pad(m, (0, pad)).reshape(rows, lanes)   # pad mask with 0 -> ignored

    grid = (rows // block_rows,)
    blk = (block_rows, lanes)

    out = pl.pallas_call(
        functools.partial(_coord_loss_kernel, beta=float(beta)),
        grid=grid,
        in_specs=[
            pl.BlockSpec(blk, lambda i: (i, 0)),   # input coords
            pl.BlockSpec(blk, lambda i: (i, 0)),   # target coords
            pl.BlockSpec(blk, lambda i: (i, 0)),   # per-element mask (int8)
        ],
        out_specs=pl.BlockSpec((1, 1), lambda i: (0, 0)),
        out_shape=jax.ShapeDtypeStruct((1, 1), jnp.float32),
        scratch_shapes=[
            pltpu.VMEM((1, 1), jnp.float32),   # running masked smooth-L1 sum
            pltpu.VMEM((1, 1), jnp.int32),     # running masked element count
        ],
        compiler_params=pltpu.CompilerParams(
            dimension_semantics=("arbitrary",),   # reduction axis (carried scratch)
        ),
        cost_estimate=pl.CostEstimate(
            flops=6 * total,
            transcendentals=0,
            bytes_accessed=2 * total * 4 + total * 1 + 4,
        ),
    )(x, t, m)
    return out[0, 0]


if __name__ == "__main__":
    key = jax.random.PRNGKey(0)
    k1, k2, k3 = jax.random.split(key, 3)

    B, L = 2, 8
    x = jax.random.normal(k1, (B, L, 3), dtype=jnp.float32)
    t = x + 0.5 * jax.random.normal(k2, (B, L, 3), dtype=jnp.float32)
    mask = jax.random.bernoulli(k3, 0.4, (B, L))
    mask = mask.at[0, 0].set(True)   # guarantee a non-empty selection

    out = unimol_coord_loss(x, t, mask)
    out = jax.block_until_ready(out)

    # Pure-JAX reference: F.smooth_l1_loss(x[mask], t[mask]), beta=1, mean reduction.
    d = x - t
    ad = jnp.abs(d)
    per = jnp.where(ad < 1.0, 0.5 * d * d, ad - 0.5)
    ref = jnp.sum(jnp.where(mask[..., None], per, 0.0)) / (3.0 * jnp.sum(mask))

    assert out.shape == () and out.dtype == jnp.float32
    assert jnp.allclose(out, ref, rtol=1e-5, atol=1e-6), (float(out), float(ref))
    print("KERNEL_OK")
</pallas_src>

<mosaic_0001>
module attributes {stable_mosaic.version = 11 : i64} {
  func.func @_coord_loss_kernel(%arg0: i32, %arg1: memref<32x256xf32, #tpu.memory_space<vmem>>, %arg2: memref<32x256xf32, #tpu.memory_space<vmem>>, %arg3: memref<32x256xi8, #tpu.memory_space<vmem>>, %arg4: memref<1x1xf32, #tpu.memory_space<vmem>>, %arg5: memref<1x1xf32, #tpu.memory_space<vmem>>, %arg6: memref<1x1xi32, #tpu.memory_space<vmem>>) attributes {dimension_semantics = [#tpu.dimension_semantics<arbitrary>], iteration_bounds = array<i64: 1>, scalar_prefetch = 0 : i64, scratch_operands = 2 : i64, tpu.core_type = #tpu.core_type<tc>, window_params = [{transform_indices = @transform_0, window_bounds = array<i64: 32, 256>}, {transform_indices = @transform_1, window_bounds = array<i64: 32, 256>}, {transform_indices = @transform_2, window_bounds = array<i64: 32, 256>}, {pipeline_mode = #tpu.pipeline_mode<synchronous>, transform_indices = @transform_3, window_bounds = array<i64: 1, 1>}]} {
    %c0_i32 = arith.constant 0 : i32
    %0 = arith.cmpi eq, %arg0, %c0_i32 : i32
    %1 = arith.extui %0 : i1 to i32
    %c0_i32_0 = arith.constant 0 : i32
    %2 = arith.cmpi ne, %1, %c0_i32_0 : i32
    scf.if %2 {
      %cst_23 = arith.constant 0.000000e+00 : f32
      %38 = vector.broadcast %cst_23 : f32 to vector<1x1xf32>
      %c0_24 = arith.constant 0 : index
      %c0_25 = arith.constant 0 : index
      %39 = vector.load %arg5[%c0_24, %c0_25] : memref<1x1xf32, #tpu.memory_space<vmem>>, vector<1x1xf32>
      tpu.vector_store %arg5[%c0_24, %c0_25], %38 {strides = array<i32>} : memref<1x1xf32, #tpu.memory_space<vmem>>, vector<1x1xf32>,
      %c0_i32_26 = arith.constant 0 : i32
      %40 = vector.broadcast %c0_i32_26 : i32 to vector<1x1xi32>
      %c0_27 = arith.constant 0 : index
      %c0_28 = arith.constant 0 : index
      %41 = vector.load %arg6[%c0_27, %c0_28] : memref<1x1xi32, #tpu.memory_space<vmem>>, vector<1x1xi32>
      tpu.vector_store %arg6[%c0_27, %c0_28], %40 {strides = array<i32>} : memref<1x1xi32, #tpu.memory_space<vmem>>, vector<1x1xi32>,
    } else {
    }
    %c0 = arith.constant 0 : index
    %c0_1 = arith.constant 0 : index
    %3 = vector.load %arg1[%c0, %c0_1] : memref<32x256xf32, #tpu.memory_space<vmem>>, vector<32x256xf32>
    %c0_2 = arith.constant 0 : index
    %c0_3 = arith.constant 0 : index
    %4 = vector.load %arg2[%c0_2, %c0_3] : memref<32x256xf32, #tpu.memory_space<vmem>>, vector<32x256xf32>
    %c0_4 = arith.constant 0 : index
    %c0_5 = arith.constant 0 : index
    %5 = vector.load %arg3[%c0_4, %c0_5] : memref<32x256xi8, #tpu.memory_space<vmem>>, vector<32x256xi8>
    %c0_i8 = arith.constant 0 : i8
    %6 = vector.broadcast %c0_i8 : i8 to vector<32x256xi8>
    %7 = arith.cmpi ne, %5, %6 : vector<32x256xi8>
    %8 = arith.subf %3, %4 : vector<32x256xf32>
    %9 = math.absf %8 : vector<32x256xf32>
    %cst = arith.constant 1.000000e+00 : f32
    %10 = vector.broadcast %cst : f32 to vector<32x256xf32>
    %11 = arith.cmpf olt, %9, %10 : vector<32x256xf32>
    %cst_6 = arith.constant 5.000000e-01 : f32
    %12 = vector.broadcast %cst_6 : f32 to vector<32x256xf32>
    %13 = arith.mulf %12, %8 : vector<32x256xf32>
    %14 = arith.mulf %13, %8 : vector<32x256xf32>
    %cst_7 = arith.constant 5.000000e-01 : f32
    %15 = vector.broadcast %cst_7 : f32 to vector<32x256xf32>
    %16 = arith.subf %9, %15 : vector<32x256xf32>
    %17 = arith.select %11, %14, %16 : vector<32x256xi1>, vector<32x256xf32>
    %cst_8 = arith.constant 0.000000e+00 : f32
    %18 = vector.broadcast %cst_8 : f32 to vector<32x256xf32>
    %19 = arith.select %7, %17, %18 : vector<32x256xi1>, vector<32x256xf32>
    %cst_9 = arith.constant dense<0.000000e+00> : vector<32xf32>
    %20 = vector.multi_reduction <add>, %19, %cst_9 [1] : vector<32x256xf32> to vector<32xf32>
    %21 = vector.shape_cast %20 : vector<32xf32> to vector<32x1xf32>
    %cst_10 = arith.constant dense<0.000000e+00> : vector<1xf32>
    %22 = vector.multi_reduction <add>, %21, %cst_10 [0] : vector<32x1xf32> to vector<1xf32>
    %23 = vector.shape_cast %22 : vector<1xf32> to vector<1x1xf32>
    %24 = arith.extui %7 : vector<32x256xi1> to vector<32x256xi32>
    %cst_11 = arith.constant dense<0> : vector<32xi32>
    %25 = vector.multi_reduction <add>, %24, %cst_11 [1] : vector<32x256xi32> to vector<32xi32>
    %26 = vector.shape_cast %25 : vector<32xi32> to vector<32x1xi32>
    %cst_12 = arith.constant dense<0> : vector<1xi32>
    %27 = vector.multi_reduction <add>, %26, %cst_12 [0] : vector<32x1xi32> to vector<1xi32>
    %28 = vector.shape_cast %27 : vector<1xi32> to vector<1x1xi32>
    %c0_13 = arith.constant 0 : index
    %c0_14 = arith.constant 0 : index
    %29 = vector.load %arg5[%c0_13, %c0_14] : memref<1x1xf32, #tpu.memory_space<vmem>>, vector<1x1xf32>
    %30 = arith.addf %29, %23 : vector<1x1xf32>
    %c0_15 = arith.constant 0 : index
    %c0_16 = arith.constant 0 : index
    %31 = vector.load %arg5[%c0_15, %c0_16] : memref<1x1xf32, #tpu.memory_space<vmem>>, vector<1x1xf32>
    tpu.vector_store %arg5[%c0_15, %c0_16], %30 {strides = array<i32>} : memref<1x1xf32, #tpu.memory_space<vmem>>, vector<1x1xf32>,
    %c0_17 = arith.constant 0 : index
    %c0_18 = arith.constant 0 : index
    %32 = vector.load %arg6[%c0_17, %c0_18] : memref<1x1xi32, #tpu.memory_space<vmem>>, vector<1x1xi32>
    %33 = arith.addi %32, %28 : vector<1x1xi32>
    %c0_19 = arith.constant 0 : index
    %c0_20 = arith.constant 0 : index
    %34 = vector.load %arg6[%c0_19, %c0_20] : memref<1x1xi32, #tpu.memory_space<vmem>>, vector<1x1xi32>
    tpu.vector_store %arg6[%c0_19, %c0_20], %33 {strides = array<i32>} : memref<1x1xi32, #tpu.memory_space<vmem>>, vector<1x1xi32>,
    %c0_i32_21 = arith.constant 0 : i32
    %35 = arith.cmpi eq, %arg0, %c0_i32_21 : i32
    %36 = arith.extui %35 : i1 to i32
    %c0_i32_22 = arith.constant 0 : i32
    %37 = arith.cmpi ne, %36, %c0_i32_22 : i32
    scf.if %37 {
      %c0_23 = arith.constant 0 : index
      %c0_24 = arith.constant 0 : index
      %38 = vector.load %arg5[%c0_23, %c0_24] : memref<1x1xf32, #tpu.memory_space<vmem>>, vector<1x1xf32>
      %c0_25 = arith.constant 0 : index
      %c0_26 = arith.constant 0 : index
      %39 = vector.load %arg6[%c0_25, %c0_26] : memref<1x1xi32, #tpu.memory_space<vmem>>, vector<1x1xi32>
      %40 = arith.sitofp %39 : vector<1x1xi32> to vector<1x1xf32>
      %41 = arith.divf %38, %40 : vector<1x1xf32>
      %c0_27 = arith.constant 0 : index
      %c0_28 = arith.constant 0 : index
      %42 = vector.load %arg4[%c0_27, %c0_28] : memref<1x1xf32, #tpu.memory_space<vmem>>, vector<1x1xf32>
      tpu.vector_store %arg4[%c0_27, %c0_28], %41 {strides = array<i32>} : memref<1x1xf32, #tpu.memory_space<vmem>>, vector<1x1xf32>,
    } else {
    }
    return
  }
  func.func @transform_0(%arg0: i32) -> (i32, i32) {
    %c0_i32 = arith.constant 0 : i32
    %c0_i32_0 = arith.constant 0 : i32
    return %arg0, %c0_i32 : i32, i32
  }
  func.func @transform_1(%arg0: i32) -> (i32, i32) {
    %c0_i32 = arith.constant 0 : i32
    %c0_i32_0 = arith.constant 0 : i32
    return %arg0, %c0_i32 : i32, i32
  }
  func.func @transform_2(%arg0: i32) -> (i32, i32) {
    %c0_i32 = arith.constant 0 : i32
    %c0_i32_0 = arith.constant 0 : i32
    return %arg0, %c0_i32 : i32, i32
  }
  func.func @transform_3(%arg0: i32) -> (i32, i32) {
    %c0_i32 = arith.constant 0 : i32
    %c0_i32_0 = arith.constant 0 : i32
    %c0_i32_1 = arith.constant 0 : i32
    return %c0_i32, %c0_i32_0 : i32, i32
  }
}

</mosaic_0001>

<llo_original>
// kernel: tpu_custom_call.1
$region0: #{tpu_custom_call.1}
  #allocation0 [shape = 'u32[]', space=smem, size = 0x4, offset = 0x4, fixed_abs, tag = 'smem constant byte address 0x4 - core index']
  #allocation1 [shape = 'u32[72,128]{1,0:T(1,128)}', space=vmem, size = 0x9000, scoped, tag = 'internal scratch']
  #allocation2 [shape = 'f32[1,1]{1,0:T(1,128)}', space=vmem, size = 0x200, scoped, tag = 'scratch operand']
  #allocation3 [shape = 's32[1,1]{1,0:T(1,128)}', space=vmem, size = 0x200, scoped, tag = 'scratch operand']
  %s0 = inlined_call_operand.hbm [shape: f32[32,256], index: 0, kind: input, shape index: {}]
  %s1 = inlined_call_operand.hbm [shape: f32[32,256], index: 1, kind: input, shape index: {}]
  %s2 = inlined_call_operand.hbm [shape: s8[32,256], index: 2, kind: input, shape index: {}]
  %s3 = inlined_call_operand.hbm [shape: f32[1,1], index: 3, kind: output, shape index: {}]
  %s4 = sld [smem:[#allocation0]]
  $region42: #{tpu_custom_call.1} parent=0
    _
  %s6 = ssub.s32 1, %s4
  %s7 = scalar_select 0, %s6, %s4
  $region1: #{tpu_custom_call.1} parent=0
    #allocation4 [shape = 'u8[32768]{0}', space=vmem, size = 0x8000, scoped, tag = 'input window, operand 0, single buffered']
    #allocation5 [shape = 's32[1]{0}', space=sflag, size = 0x4, scoped, tag = 'scoped memory for tpu_custom_call.1']
    #allocation6 [shape = 's32[1]{0}', space=sflag, size = 0x4, scoped, tag = 'scoped memory for tpu_custom_call.1']
    #allocation7 [shape = 'u8[32768]{0}', space=vmem, size = 0x8000, scoped, tag = 'input window, operand 1, single buffered']
    #allocation8 [shape = 's32[1]{0}', space=sflag, size = 0x4, scoped, tag = 'scoped memory for tpu_custom_call.1']
    #allocation9 [shape = 'u8[8192]{0}', space=vmem, size = 0x2000, scoped, tag = 'input window, operand 2, single buffered']
    #allocation10 [shape = 'u8[512]{0}', space=vmem, size = 0x400, scoped, tag = 'output window, operand 0, single buffered']
    %8 = vsyncpa [#allocation5], 0
    %9 = vsyncpa [#allocation8], 0
    %10 = vsyncpa [#allocation6], 0
    // Predicated region
    $region2: #{tpu_custom_call.1} parent=1 // pred_check
      _
    $region3: #{tpu_custom_call.1} parent=1 // pred_check_branch
      %12 = sbr.rel (0) target = $region5
    $region4: #{tpu_custom_call.1} parent=1 // pred_region
      %14 = vsyncadd [#allocation5], 0
      %s15 = sshll.u32 %s0, 4
      %s16 = int_to_ptr.hbm [resolvable:$true] %s15
      %s17 = sshll.u32 [#allocation4], 4
      %s18 = int_to_ptr.vmem [resolvable:$true] %s17
      %23 = dma.hbm_to_vmem [thread:$0]  %s16, 1024, %s18, [#allocation5], 256, 256, 16
    $region5: #{tpu_custom_call.1} parent=1 // pred_fallthru
      _
    // Predicated region
    $region6: #{tpu_custom_call.1} parent=1 // pred_check
      _
    $region7: #{tpu_custom_call.1} parent=1 // pred_check_branch
      %25 = sbr.rel (0) target = $region9
    $region8: #{tpu_custom_call.1} parent=1 // pred_region
      %27 = vsyncadd [#allocation8], 0
      %s28 = sshll.u32 %s1, 4
      %s29 = int_to_ptr.hbm [resolvable:$true] %s28
      %s30 = sshll.u32 [#allocation7], 4
      %s31 = int_to_ptr.vmem [resolvable:$true] %s30
      %36 = dma.hbm_to_vmem [thread:$0]  %s29, 1024, %s31, [#allocation8], 256, 256, 16
    $region9: #{tpu_custom_call.1} parent=1 // pred_fallthru
      _
    // Predicated region
    $region10: #{tpu_custom_call.1} parent=1 // pred_check
      _
    $region11: #{tpu_custom_call.1} parent=1 // pred_check_branch
      %38 = sbr.rel (0) target = $region13
    $region12: #{tpu_custom_call.1} parent=1 // pred_region
      %40 = vsyncadd [#allocation8], 0
      %s42 = sshll.u32 %s2, 4
      %s43 = int_to_ptr.hbm [resolvable:$true] %s42
      %s44 = sshll.u32 [#allocation9], 4
      %s45 = int_to_ptr.vmem [resolvable:$true] %s44
      %47 = dma.hbm_to_vmem [thread:$0]  %s43, 256, %s45, [#allocation8]
    $region13: #{tpu_custom_call.1} parent=1 // pred_fallthru
      _
    // Predicated region
    $region14: #{tpu_custom_call.1} parent=1 // pred_check
      _
    $region15: #{tpu_custom_call.1} parent=1 // pred_check_branch
      %49 = sbr.rel (0) target = $region17
    $region16: #{tpu_custom_call.1} parent=1 // pred_region
      %51 = dma.done [#allocation5], 1024
    $region17: #{tpu_custom_call.1} parent=1 // pred_fallthru
      _
    // Predicated region
    $region18: #{tpu_custom_call.1} parent=1 // pred_check
      _
    $region19: #{tpu_custom_call.1} parent=1 // pred_check_branch
      %53 = sbr.rel (0) target = $region21
    $region20: #{tpu_custom_call.1} parent=1 // pred_region
      %55 = dma.done [#allocation8], 1024
    $region21: #{tpu_custom_call.1} parent=1 // pred_fallthru
      _
    // Predicated region
    $region22: #{tpu_custom_call.1} parent=1 // pred_check
      _
    $region23: #{tpu_custom_call.1} parent=1 // pred_check_branch
      %57 = sbr.rel (0) target = $region25
    $region24: #{tpu_custom_call.1} parent=1 // pred_region
      %59 = dma.done [#allocation8], 256
    $region25: #{tpu_custom_call.1} parent=1 // pred_fallthru
      _
    %p62 = scmp.eq.s32.totalorder 0, 0
    // Predicated region
    $region26: #{tpu_custom_call.1} parent=1 // pred_check
      %p63 = pneg %p62
    $region27: #{tpu_custom_call.1} parent=1 // pred_check_branch
      %65 = sbr.rel (%p63) target = $region29
    $region28: #{tpu_custom_call.1} parent=1 // pred_region
      %vm66 = vcmask 0
      %67 = vst.msk [vmem:[#allocation2] sm:$0x1] %vm66, 0.0
      %68 = vst.msk [vmem:[#allocation3] sm:$0x1] %vm66, 0
    $region29: #{tpu_custom_call.1} parent=1 // pred_fallthru
      _
    %v69 = vld [vmem:[#allocation4] sm:$0xff]
    %v70 = vld [vmem:[#allocation4 + $0x8] sm:$0xff]
    %v71 = vld [vmem:[#allocation4 + $0x10] sm:$0xff]
    %v72 = vld [vmem:[#allocation4 + $0x18] sm:$0xff]
    %v73 = vld [vmem:[#allocation4 + $0x20] sm:$0xff]
    %v74 = vld [vmem:[#allocation4 + $0x28] sm:$0xff]
    %v75 = vld [vmem:[#allocation4 + $0x30] sm:$0xff]
    %v76 = vld [vmem:[#allocation4 + $0x38] sm:$0xff]
    %v77 = vld [vmem:[#allocation7] sm:$0xff]
    %v78 = vld [vmem:[#allocation7 + $0x8] sm:$0xff]
    %v79 = vld [vmem:[#allocation7 + $0x10] sm:$0xff]
    %v80 = vld [vmem:[#allocation7 + $0x18] sm:$0xff]
    %v81 = vld [vmem:[#allocation7 + $0x20] sm:$0xff]
    %v82 = vld [vmem:[#allocation7 + $0x28] sm:$0xff]
    %v83 = vld [vmem:[#allocation7 + $0x30] sm:$0xff]
    %v84 = vld [vmem:[#allocation7 + $0x38] sm:$0xff]
    %v85 = vld [vmem:[#allocation9] sm:$0xff]
    %v86 = vld [vmem:[#allocation9 + $0x8] sm:$0xff]
    %vm87 = vnez %v85
    %vm88 = vnez %v86
    %v89 = vsub.f32 %v69, %v77
    %v90 = vsub.f32 %v70, %v78
    %v91 = vsub.f32 %v71, %v79
    %v92 = vsub.f32 %v72, %v80
    %v93 = vsub.f32 %v73, %v81
    %v94 = vsub.f32 %v74, %v82
    %v95 = vsub.f32 %v75, %v83
    %v96 = vsub.f32 %v76, %v84
    %v97 = vand.u32 2147483647, %v89
    %v98 = vand.u32 2147483647, %v90
    %v99 = vand.u32 2147483647, %v91
    %v100 = vand.u32 2147483647, %v92
    %v101 = vand.u32 2147483647, %v93
    %v102 = vand.u32 2147483647, %v94
    %v103 = vand.u32 2147483647, %v95
    %v104 = vand.u32 2147483647, %v96
    %vm105 = vcmp.lt.f32.partialorder %v97, 1.0
    %vm106 = vcmp.lt.f32.partialorder %v98, 1.0
    %vm107 = vcmp.lt.f32.partialorder %v99, 1.0
    %vm108 = vcmp.lt.f32.partialorder %v100, 1.0
    %vm109 = vcmp.lt.f32.partialorder %v101, 1.0
    %vm110 = vcmp.lt.f32.partialorder %v102, 1.0
    %vm111 = vcmp.lt.f32.partialorder %v103, 1.0
    %vm112 = vcmp.lt.f32.partialorder %v104, 1.0
    %v113 = vmul.f32 %v89, 0.5
    %v114 = vmul.f32 %v90, 0.5
    %v115 = vmul.f32 %v91, 0.5
    %v116 = vmul.f32 %v92, 0.5
    %v117 = vmul.f32 %v93, 0.5
    %v118 = vmul.f32 %v94, 0.5
    %v119 = vmul.f32 %v95, 0.5
    %v120 = vmul.f32 %v96, 0.5
    %v121 = vmul.f32 %v113, %v89
    %v122 = vmul.f32 %v114, %v90
    %v123 = vmul.f32 %v115, %v91
    %v124 = vmul.f32 %v116, %v92
    %v125 = vmul.f32 %v117, %v93
    %v126 = vmul.f32 %v118, %v94
    %v127 = vmul.f32 %v119, %v95
    %v128 = vmul.f32 %v120, %v96
    %v129 = vsub.f32 %v97, 0.5
    %v130 = vsub.f32 %v98, 0.5
    %v131 = vsub.f32 %v99, 0.5
    %v132 = vsub.f32 %v100, 0.5
    %v133 = vsub.f32 %v101, 0.5
    %v134 = vsub.f32 %v102, 0.5
    %v135 = vsub.f32 %v103, 0.5
    %v136 = vsub.f32 %v104, 0.5
    %v137 = vsel %vm105, %v121, %v129
    %v138 = vsel %vm106, %v122, %v130
    %v139 = vsel %vm107, %v123, %v131
    %v140 = vsel %vm108, %v124, %v132
    %v141 = vsel %vm109, %v125, %v133
    %v142 = vsel %vm110, %v126, %v134
    %v143 = vsel %vm111, %v127, %v135
    %v144 = vsel %vm112, %v128, %v136
    %v145 = vsel %vm87, 16843009, 0
    %v146 = vsel %vm88, 16843009, 0
    %v147 = vunpack.c.0.s8 %v145
    %v148 = vunpack.c.0.s8 %v146
    %v149 = vunpack.c.1.s8 %v145
    %v150 = vunpack.c.1.s8 %v146
    %v151 = vunpack.c.2.s8 %v145
    %v152 = vunpack.c.2.s8 %v146
    %v153 = vunpack.c.3.s8 %v145
    %v154 = vunpack.c.3.s8 %v146
    %v155 = vpack.c.b16 %v148, %v147
    %v156 = vpack.c.b8 %v155, %v155
    %v157 = vpack.c.b16 %v150, %v149
    %v158 = vpack.c.b8 %v157, %v157
    %v159 = vpack.c.b16 %v152, %v151
    %v160 = vpack.c.b8 %v159, %v159
    %v161 = vpack.c.b16 %v154, %v153
    %v162 = vpack.c.b8 %v161, %v161
    %vm163 = vnez %v156
    %vm164 = vnez %v158
    %vm165 = vnez %v160
    %vm166 = vnez %v162
    %v167 = vsel %vm163, 16843009, 0
    %v168 = vsel %vm164, 16843009, 0
    %v169 = vsel %vm165, 16843009, 0
    %v170 = vsel %vm166, 16843009, 0
    %v171 = vunpack.c.0.s8 %v167
    %v172 = vunpack.c.1.s8 %v167
    %v173 = vunpack.c.0.s8 %v168
    %v174 = vunpack.c.1.s8 %v168
    %v175 = vunpack.c.0.s8 %v169
    %v176 = vunpack.c.1.s8 %v169
    %v177 = vunpack.c.0.s8 %v170
    %v178 = vunpack.c.1.s8 %v170
    %vm179 = vcmp.ne.s32.totalorder %v171, 0
    %vm180 = vcmp.ne.s32.totalorder %v172, 0
    %vm181 = vcmp.ne.s32.totalorder %v173, 0
    %vm182 = vcmp.ne.s32.totalorder %v174, 0
    %vm183 = vcmp.ne.s32.totalorder %v175, 0
    %vm184 = vcmp.ne.s32.totalorder %v176, 0
    %vm185 = vcmp.ne.s32.totalorder %v177, 0
    %vm186 = vcmp.ne.s32.totalorder %v178, 0
    %v187 = vsel %vm179, %v137, 0.0
    %v188 = vsel %vm180, %v138, 0.0
    %v189 = vsel %vm181, %v139, 0.0
    %v190 = vsel %vm182, %v140, 0.0
    %v191 = vsel %vm183, %v141, 0.0
    %v192 = vsel %vm184, %v142, 0.0
    %v193 = vsel %vm185, %v143, 0.0
    %v194 = vsel %vm186, %v144, 0.0
    %v195 = vadd.f32 %v187, %v188
    %196 = vadd.xlane.f32.xlu0 %v195
    %v197 = vpop.xlane.xlu0 %196
    %v198 = vadd.f32 %v189, %v190
    %199 = vadd.xlane.f32.xlu0 %v198
    %v200 = vpop.xlane.xlu0 %199
    %v201 = vadd.f32 %v191, %v192
    %202 = vadd.xlane.f32.xlu0 %v201
    %v203 = vpop.xlane.xlu0 %202
    %v204 = vadd.f32 %v193, %v194
    %205 = vadd.xlane.f32.xlu0 %v204
    %v206 = vpop.xlane.xlu0 %205
    %v207 = vadd.f32 %v197, %v200
    %v208 = vadd.f32 %v207, %v203
    %v209 = vadd.f32 %v208, %v206
    %v210 = vrot.slane %v209, 4
    %v211 = vadd.f32 %v209, %v210
    %v212 = vrot.slane %v211, 2
    %v213 = vadd.f32 %v211, %v212
    %v214 = vrot.slane %v213, 1
    %v215 = vadd.f32 %v213, %v214
    %v216 = vsel %vm179, 1, 0
    %v217 = vsel %vm180, 1, 0
    %v218 = vsel %vm181, 1, 0
    %v219 = vsel %vm182, 1, 0
    %v220 = vsel %vm183, 1, 0
    %v221 = vsel %vm184, 1, 0
    %v222 = vsel %vm185, 1, 0
    %v223 = vsel %vm186, 1, 0
    %v224 = vadd.s32 %v216, %v217
    %v225 = vand.u32 %v224, 65535
    %v226 = vshrl.u32 %v224, 16
    %v227 = vcvt.s32.f32 %v225
    %v228 = vcvt.s32.f32 %v226
    %229 = vadd.xlane.f32.xlu0 %v227
    %v230 = vpop.xlane.xlu0 %229
    %231 = vadd.xlane.f32.xlu0 %v228
    %v232 = vpop.xlane.xlu0 %231
    %v233 = vcvt.f32.s32 %v230
    %v234 = vcvt.f32.s32 %v232
    %v235 = vshll.u32 %v234, 16
    %v236 = vadd.s32 %v235, %v233
    %v237 = vadd.s32 %v218, %v219
    %v238 = vand.u32 %v237, 65535
    %v239 = vshrl.u32 %v237, 16
    %v240 = vcvt.s32.f32 %v238
    %v241 = vcvt.s32.f32 %v239
    %242 = vadd.xlane.f32.xlu0 %v240
    %v243 = vpop.xlane.xlu0 %242
    %244 = vadd.xlane.f32.xlu0 %v241
    %v245 = vpop.xlane.xlu0 %244
    %v246 = vcvt.f32.s32 %v243
    %v247 = vcvt.f32.s32 %v245
    %v248 = vshll.u32 %v247, 16
    %v249 = vadd.s32 %v248, %v246
    %v250 = vadd.s32 %v220, %v221
    %v251 = vand.u32 %v250, 65535
    %v252 = vshrl.u32 %v250, 16
    %v253 = vcvt.s32.f32 %v251
    %v254 = vcvt.s32.f32 %v252
    %255 = vadd.xlane.f32.xlu0 %v253
    %v256 = vpop.xlane.xlu0 %255
    %257 = vadd.xlane.f32.xlu0 %v254
    %v258 = vpop.xlane.xlu0 %257
    %v259 = vcvt.f32.s32 %v256
    %v260 = vcvt.f32.s32 %v258
    %v261 = vshll.u32 %v260, 16
    %v262 = vadd.s32 %v261, %v259
    %v263 = vadd.s32 %v222, %v223
    %v264 = vand.u32 %v263, 65535
    %v265 = vshrl.u32 %v263, 16
    %v266 = vcvt.s32.f32 %v264
    %v267 = vcvt.s32.f32 %v265
    %268 = vadd.xlane.f32.xlu0 %v266
    %v269 = vpop.xlane.xlu0 %268
    %270 = vadd.xlane.f32.xlu0 %v267
    %v271 = vpop.xlane.xlu0 %270
    %v272 = vcvt.f32.s32 %v269
    %v273 = vcvt.f32.s32 %v271
    %v274 = vshll.u32 %v273, 16
    %v275 = vadd.s32 %v274, %v272
    %v276 = vadd.s32 %v236, %v249
    %v277 = vadd.s32 %v262, %v275
    %v278 = vadd.s32 %v276, %v277
    %v279 = vrot.slane %v278, 4
    %v280 = vadd.s32 %v278, %v279
    %v281 = vrot.slane %v280, 2
    %v282 = vadd.s32 %v280, %v281
    %v283 = vrot.slane %v282, 1
    %v284 = vadd.s32 %v282, %v283
    %v285 = vld [vmem:[#allocation2] sm:$0x1]
    %v286 = vadd.f32 %v285, %v215
    %vm287 = vcmask 0
    %288 = vst.msk [vmem:[#allocation2] sm:$0x1] %vm287, %v286
    %v289 = vld [vmem:[#allocation3] sm:$0x1]
    %v290 = vadd.s32 %v289, %v284
    %291 = vst.msk [vmem:[#allocation3] sm:$0x1] %vm287, %v290
    // Predicated region
    $region30: #{tpu_custom_call.1} parent=1 // pred_check
      %p292 = pneg %p62
    $region31: #{tpu_custom_call.1} parent=1 // pred_check_branch
      %294 = sbr.rel (%p292) target = $region33
    $region32: #{tpu_custom_call.1} parent=1 // pred_region
      %v295 = vld [vmem:[#allocation2] sm:$0x1]
      %v296 = vld [vmem:[#allocation3] sm:$0x1]
      %v297 = vcvt.s32.f32 %v296
      %v298 = vrcp.pop %v297
      %v299 = vmul.f32 %v297, %v298
      %v300 = vsub.f32 1.0, %v299
      %v301 = vmul.f32 %v298, %v300
      %v302 = vadd.f32 %v298, %v301
      %vm303 = vweird.f32 %v297
      %vm304 = vweird.f32 %v298
      %vm305 = vmor %vm303, %vm304
      %v306 = vsel %vm305, %v298, %v302
      %v307 = vand.u32 2147483647, %v297
      %vm308 = vcmp.eq.f32.partialorder %v307, 8.507059e+37
      %v309 = vand.u32 %v297, 2147483648
      %v310 = vor.u32 1.1754944e-38, %v309
      %v311 = vsel %vm308, %v310, %v306
      %v312 = vmul.f32 %v295, %v311
      %313 = vst.msk [vmem:[#allocation10] sm:$0x1] %vm287, %v312
    $region33: #{tpu_custom_call.1} parent=1 // pred_fallthru
      _
    // Predicated region
    $region34: #{tpu_custom_call.1} parent=1 // pred_check
      _
    $region35: #{tpu_custom_call.1} parent=1 // pred_check_branch
      %315 = sbr.rel (0) target = $region37
    $region36: #{tpu_custom_call.1} parent=1 // pred_region
      %317 = vsyncadd [#allocation6], 0
      %s319 = sshll.u32 [#allocation10], 4
      %s320 = int_to_ptr.vmem [resolvable:$true] %s319
      %s321 = sshll.u32 %s3, 4
      %s322 = int_to_ptr.hbm [resolvable:$true] %s321
      %324 = dma.vmem_to_hbm [thread:$0]  %s320, 16, %s322, [#allocation6]
    $region37: #{tpu_custom_call.1} parent=1 // pred_fallthru
      _
    // Predicated region
    $region38: #{tpu_custom_call.1} parent=1 // pred_check
      _
    $region39: #{tpu_custom_call.1} parent=1 // pred_check_branch
      %326 = sbr.rel (0) target = $region41
    $region40: #{tpu_custom_call.1} parent=1 // pred_region
      %328 = dma.done [#allocation6], 16
    $region41: #{tpu_custom_call.1} parent=1 // pred_fallthru
      _
    %329 = vsyncpa [#allocation5], 1
    %330 = vsyncpa [#allocation8], 1
    %331 = vsyncpa [#allocation6], 1

</llo_original>
